<compile_context>
chip_gen: v6e
topology: v6e:2x2x1
jax: 0.10.0
libtpu: 0.0.40
codegen_flags: <defaults>
</compile_context>

<pallas_src>
import functools

import jax
import jax.numpy as jnp
from jax.experimental import pallas as pl
from jax.experimental.pallas import tpu as pltpu


def _label_smoothing_kernel(pred_ref, tgt_ref, out_ref, *, smoothing, confidence,
                            classes, total_n):
    # pred_ref: (tile_n, C) float   tgt_ref: (tile_n, 1) int32   out_ref: (1, 1, 1) f32
    i = pl.program_id(0)

    pred = pred_ref[...].astype(jnp.float32)                  # upcast in-register (bf16 ok)
    tn, c = pred.shape

    # --- log-softmax pieces only (logp itself is never materialized) ---
    row_max = jnp.max(pred, axis=-1, keepdims=True)            # (tn, 1)   XLU reduce #1
    shifted = pred - row_max                                    # (tn, C)
    lse = jnp.log(jnp.sum(jnp.exp(shifted), axis=-1,            # (tn, 1)   XLU reduce #2
                          keepdims=True))

    # --- fused one-hot gather + smoothing weights (single weighted lane reduction) ---
    # true_dist[r, c] = confidence if c == tgt_r else smoothing / (classes - 1); sum_c = 1.
    smooth_val = jnp.float32(smoothing / (classes - 1))
    col_ids = jax.lax.broadcasted_iota(jnp.int32, (tn, c), 1)
    tgt = tgt_ref[...]                                          # (tn, 1) int32
    w = jnp.where(col_ids == tgt, jnp.float32(confidence), smooth_val)
    weighted = jnp.sum(w * shifted, axis=-1, keepdims=True)     # (tn, 1)   XLU reduce #3

    # loss_row = sum_c(-true_dist * (shifted - lse)) = lse * sum_c(true_dist) - weighted
    per_row = lse - weighted                                    # (tn, 1)

    # --- mask padded rows of a ragged last tile (drops any NaN/inf from garbage rows) ---
    row_ids = i * tn + jax.lax.broadcasted_iota(jnp.int32, (tn, 1), 0)
    per_row = jnp.where(row_ids < total_n, per_row, 0.0)

    partial = jnp.sum(per_row)                                  # scalar f32 tile partial
    out_ref[...] = jnp.reshape(partial, (1, 1, 1))


def _choose_tile_n(n, c, itemsize):
    """Pick tile_n from a VMEM byte budget (no artificial row cap)."""
    lanes = 128
    padded_c = ((c + lanes - 1) // lanes) * lanes
    pred_row = padded_c * itemsize          # streamed pred tile, per-row VMEM bytes
    f32_row = padded_c * 4                  # in-kernel f32 temporaries (shifted / exp / w*shifted)
    tgt_row = lanes * 4                     # (tile_n, 1) int32 column lane-pads to 128
    # 2x double-buffered input streams + ~2 resident f32 temporaries during compute.
    per_row = 2 * (pred_row + tgt_row) + 2 * f32_row
    budget = 24 * 1024 * 1024               # leaves headroom under vmem_limit_bytes below
    tn = budget // max(1, per_row)
    tn = int(max(8, tn))                    # 8-row floor (f32 sublane multiple)
    tn = (tn // 8) * 8
    # TODO(synk): for vocab-scale C where even 8 rows exceed the budget, tile the class axis
    # with a two-pass / online-LSE reduction instead of relying on the row floor.
    if n <= tn:
        return n                            # single full-extent tile is always legal
    return tn


def label_smoothing_loss(pred, target, *, classes, smoothing=0.01, tile_n=None):
    """pred: (N, C) float (f32 or bf16 — streamed as-is), target: (N,) int -> scalar f32 loss."""
    confidence = 1.0 - smoothing
    n, c = pred.shape
    assert c == classes
    tgt2d = target.astype(jnp.int32).reshape(n, 1)

    if tile_n is None:
        tile_n = _choose_tile_n(n, c, pred.dtype.itemsize)
    tile_n = min(tile_n, n)
    if tile_n < n:
        tile_n = max(8, (tile_n // 8) * 8)   # keep sub-full blocks sublane-aligned
    num_tiles = pl.cdiv(n, tile_n)

    kernel = functools.partial(
        _label_smoothing_kernel,
        smoothing=smoothing,
        confidence=confidence,
        classes=classes,
        total_n=n,
    )

    partials = pl.pallas_call(
        kernel,
        out_shape=jax.ShapeDtypeStruct((num_tiles, 1, 1), jnp.float32),
        grid=(num_tiles,),
        in_specs=[
            pl.BlockSpec((tile_n, c), lambda i: (i, 0)),   # pred tile, classes lane-dense
            pl.BlockSpec((tile_n, 1), lambda i: (i, 0)),   # target ids for this tile
        ],
        out_specs=pl.BlockSpec((1, 1, 1), lambda i: (i, 0, 0)),  # per-tile partial sum
        compiler_params=pltpu.CompilerParams(
            dimension_semantics=("parallel",),             # independent tiles -> megacore on v7x
            vmem_limit_bytes=40 * 1024 * 1024,             # covers 2x buffers + temporaries,
        ),                                                 # < 64 MiB physical VMEM on v7x
    )(pred, tgt2d)

    # Final tree-sum of tile partials + mean over the TRUE batch size, outside the kernel.
    return jnp.sum(partials) / jnp.float32(n)


def _reference(pred, target, *, classes, smoothing=0.01):
    confidence = 1.0 - smoothing
    logp = jax.nn.log_softmax(pred.astype(jnp.float32), axis=-1)
    true_dist = jnp.full_like(logp, smoothing / (classes - 1))
    true_dist = true_dist.at[jnp.arange(pred.shape[0]), target].set(confidence)
    return jnp.mean(jnp.sum(-true_dist * logp, axis=-1))


if __name__ == "__main__":
    key = jax.random.PRNGKey(0)
    classes = 32

    # Small demo shape (single full-extent tile).
    n = 8
    k1, k2 = jax.random.split(key)
    pred = jax.random.normal(k1, (n, classes), dtype=jnp.float32)
    target = jax.random.randint(k2, (n,), 0, classes, dtype=jnp.int32)
    loss = jax.block_until_ready(
        label_smoothing_loss(pred, target, classes=classes, smoothing=0.01))
    ref = _reference(pred, target, classes=classes, smoothing=0.01)
    assert jnp.allclose(loss, ref, atol=1e-5, rtol=1e-5), (loss, ref)

    # Tiled + parallel-partials path with a ragged last tile: N=40, tile_n=16 -> grid=(3,).
    n2 = 40
    k3, k4 = jax.random.split(k2)
    pred2 = jax.random.normal(k3, (n2, classes), dtype=jnp.float32)
    target2 = jax.random.randint(k4, (n2,), 0, classes, dtype=jnp.int32)
    loss2 = jax.block_until_ready(
        label_smoothing_loss(pred2, target2, classes=classes, smoothing=0.01, tile_n=16))
    ref2 = _reference(pred2, target2, classes=classes, smoothing=0.01)
    assert jnp.allclose(loss2, ref2, atol=1e-5, rtol=1e-5), (loss2, ref2)

    print("KERNEL_OK")
</pallas_src>

<mosaic_0001>
module attributes {stable_mosaic.version = 11 : i64} {
  func.func @_label_smoothing_kernel(%arg0: i32, %arg1: memref<8x32xf32, #tpu.memory_space<vmem>>, %arg2: memref<8x1xi32, #tpu.memory_space<vmem>>, %arg3: memref<1x1x1xf32, #tpu.memory_space<vmem>>) attributes {dimension_semantics = [#tpu.dimension_semantics<parallel>], iteration_bounds = array<i64: 1>, scalar_prefetch = 0 : i64, scratch_operands = 0 : i64, tpu.core_type = #tpu.core_type<tc>, window_params = [{transform_indices = @transform_0, window_bounds = array<i64: 8, 32>}, {transform_indices = @transform_1, window_bounds = array<i64: 8, 1>}, {transform_indices = @transform_2, window_bounds = array<i64: 1, 1, 1>}]} {
    %c0 = arith.constant 0 : index
    %c0_0 = arith.constant 0 : index
    %0 = vector.load %arg1[%c0, %c0_0] : memref<8x32xf32, #tpu.memory_space<vmem>>, vector<8x32xf32>
    %cst = arith.constant dense<0xFF800000> : vector<8xf32>
    %1 = vector.multi_reduction <maximumf>, %0, %cst [1] : vector<8x32xf32> to vector<8xf32>
    %2 = vector.shape_cast %1 : vector<8xf32> to vector<8x1xf32>
    %3 = vector.broadcast %2 : vector<8x1xf32> to vector<8x32xf32>
    %4 = arith.subf %0, %3 : vector<8x32xf32>
    %5 = math.exp %4 : vector<8x32xf32>
    %cst_1 = arith.constant dense<0.000000e+00> : vector<8xf32>
    %6 = vector.multi_reduction <add>, %5, %cst_1 [1] : vector<8x32xf32> to vector<8xf32>
    %7 = vector.shape_cast %6 : vector<8xf32> to vector<8x1xf32>
    %8 = math.log %7 : vector<8x1xf32>
    %9 = tpu.iota {dimensions = array<i32: 1>} : vector<8x32xi32>
    %c0_2 = arith.constant 0 : index
    %c0_3 = arith.constant 0 : index
    %10 = vector.load %arg2[%c0_2, %c0_3] : memref<8x1xi32, #tpu.memory_space<vmem>>, vector<8x1xi32>
    %11 = vector.broadcast %10 : vector<8x1xi32> to vector<8x32xi32>
    %12 = arith.cmpi eq, %9, %11 : vector<8x32xi32>
    %cst_4 = arith.constant 9.900000e-01 : f32
    %cst_5 = arith.constant 3.22580658E-4 : f32
    %13 = vector.broadcast %cst_4 : f32 to vector<8x32xf32>
    %14 = vector.broadcast %cst_5 : f32 to vector<8x32xf32>
    %15 = arith.select %12, %13, %14 : vector<8x32xi1>, vector<8x32xf32>
    %16 = arith.mulf %15, %4 : vector<8x32xf32>
    %cst_6 = arith.constant dense<0.000000e+00> : vector<8xf32>
    %17 = vector.multi_reduction <add>, %16, %cst_6 [1] : vector<8x32xf32> to vector<8xf32>
    %18 = vector.shape_cast %17 : vector<8xf32> to vector<8x1xf32>
    %19 = arith.subf %8, %18 : vector<8x1xf32>
    %c8_i32 = arith.constant 8 : i32
    %20 = arith.muli %arg0, %c8_i32 : i32
    %21 = tpu.iota {dimensions = array<i32: 0>} : vector<8x1xi32>
    %22 = vector.broadcast %20 : i32 to vector<8x1xi32>
    %23 = arith.addi %22, %21 : vector<8x1xi32>
    %c8_i32_7 = arith.constant 8 : i32
    %24 = vector.broadcast %c8_i32_7 : i32 to vector<8x1xi32>
    %25 = arith.cmpi slt, %23, %24 : vector<8x1xi32>
    %cst_8 = arith.constant 0.000000e+00 : f32
    %26 = vector.broadcast %cst_8 : f32 to vector<8x1xf32>
    %27 = arith.select %25, %19, %26 : vector<8x1xi1>, vector<8x1xf32>
    %28 = vector.shape_cast %27 : vector<8x1xf32> to vector<1x8x1xf32>
    %cst_9 = arith.constant dense<0.000000e+00> : vector<1xf32>
    %29 = vector.multi_reduction <add>, %28, %cst_9 [1, 2] : vector<1x8x1xf32> to vector<1xf32>
    %30 = vector.shape_cast %29 : vector<1xf32> to vector<1x1x1xf32>
    %31 = vector.extract %30[0, 0, 0] : f32 from vector<1x1x1xf32>
    %32 = vector.broadcast %31 : f32 to vector<1x1x1xf32>
    %c0_10 = arith.constant 0 : index
    %c0_11 = arith.constant 0 : index
    %c0_12 = arith.constant 0 : index
    %33 = vector.load %arg3[%c0_10, %c0_11, %c0_12] : memref<1x1x1xf32, #tpu.memory_space<vmem>>, vector<1x1x1xf32>
    tpu.vector_store %arg3[%c0_10, %c0_11, %c0_12], %32 {strides = array<i32>} : memref<1x1x1xf32, #tpu.memory_space<vmem>>, vector<1x1x1xf32>,
    return
  }
  func.func @transform_0(%arg0: i32) -> (i32, i32) {
    %c0_i32 = arith.constant 0 : i32
    %c0_i32_0 = arith.constant 0 : i32
    return %arg0, %c0_i32 : i32, i32
  }
  func.func @transform_1(%arg0: i32) -> (i32, i32) {
    %c0_i32 = arith.constant 0 : i32
    %c0_i32_0 = arith.constant 0 : i32
    return %arg0, %c0_i32 : i32, i32
  }
  func.func @transform_2(%arg0: i32) -> (i32, i32, i32) {
    %c0_i32 = arith.constant 0 : i32
    %c0_i32_0 = arith.constant 0 : i32
    %c0_i32_1 = arith.constant 0 : i32
    return %arg0, %c0_i32, %c0_i32_0 : i32, i32, i32
  }
}

</mosaic_0001>

<llo_original>
// kernel: tpu_custom_call.1
$region0: #{tpu_custom_call.1}
  #allocation0 [shape = 'u32[]', space=smem, size = 0x4, offset = 0x4, fixed_abs, tag = 'smem constant byte address 0x4 - core index']
  #allocation1 [shape = 'u32[144,128]{1,0:T(1,128)}', space=vmem, size = 0x12000, scoped, tag = 'internal scratch']
  %s0 = inlined_call_operand.vmem [shape: f32[8,32], index: 0, kind: input, shape index: {}]
  %s1 = inlined_call_operand.vmem [shape: s32[8,1], index: 1, kind: input, shape index: {}]
  %s2 = inlined_call_operand.hbm [shape: f32[1,1,1], index: 2, kind: output, shape index: {}]
  %s3 = sld [smem:[#allocation0]]
  $region18: #{tpu_custom_call.1} parent=0
    _
  %s5 = ssub.s32 1, %s3
  %s6 = scalar_select 0, %s5, %s3
  $region1: #{tpu_custom_call.1} parent=0
    #allocation2 [shape = 'u8[512]{0}', space=vmem, size = 0x400, scoped, tag = 'output window, operand 0, single buffered']
    #allocation3 [shape = 's32[1]{0}', space=sflag, size = 0x4, scoped, tag = 'scoped memory for tpu_custom_call.1']
    %7 = vsyncpa [#allocation3], 0
    // Predicated region
    $region2: #{tpu_custom_call.1} parent=1 // pred_check
      _
    $region3: #{tpu_custom_call.1} parent=1 // pred_check_branch
      %9 = sbr.rel (0) target = $region5
    $region4: #{tpu_custom_call.1} parent=1 // pred_region
      _
    $region5: #{tpu_custom_call.1} parent=1 // pred_fallthru
      _
    // Predicated region
    $region6: #{tpu_custom_call.1} parent=1 // pred_check
      _
    $region7: #{tpu_custom_call.1} parent=1 // pred_check_branch
      %11 = sbr.rel (0) target = $region9
    $region8: #{tpu_custom_call.1} parent=1 // pred_region
      _
    $region9: #{tpu_custom_call.1} parent=1 // pred_fallthru
      _
    %v12 = vld [vmem:[%s0] sm:$0xff]
    %vm13 = vcmask 261120
    %v14 = vsel %vm13, %v12, -inf
    %15 = vmax.xlane.f32.xlu0 %v14
    %v16 = vpop.xlane.xlu0 %15
    %v17 = vsub.f32 %v12, %v16
    %v18 = vmul.f32 %v17, 1.442695
    %v19 = vpow.pop %v18
    %v20 = vsel %vm13, %v19, 0.0
    %21 = vadd.xlane.f32.xlu0 %v20
    %v22 = vpop.xlane.xlu0 %21
    %v23 = vlog2.pop %v22
    %v24 = vmul.f32 %v23, 0.6931472
    %v25 = vlaneseq
    %v26 = vand.u32 %v25, 127
    %v27 = vld [vmem:[%s1] sm:$0xff]
    %28 = vset.pattern.permute.xlu0 0
    %29 = vperm.xlu0 %28, %v27
    %v30 = vpop.permute.xlu0 %29
    %vm31 = vcmp.eq.s32.totalorder %v26, %v30
    %v32 = vsel %vm31, 0.99, 0.00032258066
    %v33 = vmul.f32 %v32, %v17
    %v34 = vsel %vm13, %v33, 0.0
    %35 = vadd.xlane.f32.xlu0 %v34
    %v36 = vpop.xlane.xlu0 %35
    %v37 = vsub.f32 %v24, %v36
    %s38 = smul.u32 0, 8
    %v39 = vlaneseq
    %v40 = vshrl.u32 %v39, 7
    %v41 = vstv %s38
    %v42 = vadd.s32 %v41, %v40
    %vm43 = vcmp.lt.s32.totalorder %v42, 8
    %v44 = vsel %vm43, %v37, 0.0
    %vm45 = vcmask 7168
    %v46 = vsel %vm45, %v44, 0.0
    %47 = vadd.xlane.f32.xlu0 %v46
    %v48 = vpop.xlane.xlu0 %47
    %v49 = vrot.slane %v48, 4
    %v50 = vadd.f32 %v48, %v49
    %v51 = vrot.slane %v50, 2
    %v52 = vadd.f32 %v50, %v51
    %v53 = vrot.slane %v52, 1
    %v54 = vadd.f32 %v52, %v53
    %s55 = vtos %v54
    %v56 = vstv %s55
    %vm57 = vcmask 0
    %58 = vst.msk [vmem:[#allocation2] sm:$0x1] %vm57, %v56
    // Predicated region
    $region10: #{tpu_custom_call.1} parent=1 // pred_check
      _
    $region11: #{tpu_custom_call.1} parent=1 // pred_check_branch
      %60 = sbr.rel (0) target = $region13
    $region12: #{tpu_custom_call.1} parent=1 // pred_region
      %s62 = ssub.s32 16, 16
      %63 = vsyncadd [#allocation3], %s62
      %s65 = sshll.u32 [#allocation2], 4
      %s66 = int_to_ptr.vmem [resolvable:$true] %s65
      %68 = dma.vmem_to_hbm [thread:$0]  %s66, 16, %s2, [#allocation3]
    $region13: #{tpu_custom_call.1} parent=1 // pred_fallthru
      _
    // Predicated region
    $region14: #{tpu_custom_call.1} parent=1 // pred_check
      _
    $region15: #{tpu_custom_call.1} parent=1 // pred_check_branch
      %70 = sbr.rel (0) target = $region17
    $region16: #{tpu_custom_call.1} parent=1 // pred_region
      %71 = dma.done [#allocation3], 16
    $region17: #{tpu_custom_call.1} parent=1 // pred_fallthru
      _
    %72 = vsyncpa [#allocation3], 1

</llo_original>
